<compile_context>
chip_gen: v5e
topology: v5e:2x2
jax: 0.10.0
libtpu: 0.0.40
codegen_flags: <defaults>
</compile_context>

<pallas_src>
import functools

import jax
import jax.numpy as jnp
from jax.experimental import pallas as pl
from jax.experimental.pallas import tpu as pltpu

_EPS = 1e-12  # matches torch.nn.functional.normalize default eps


def _round_up(v, m):
    return ((v + m - 1) // m) * m


def _am_softmax_linear_kernel(x_ref, wt_ref, inv_ref, o_ref):
    # x_ref: (tm, k), wt_ref: (k, tn), inv_ref: (1, tn) f32, o_ref: (tm, tn)
    acc = jnp.dot(x_ref[...], wt_ref[...], preferred_element_type=jnp.float32)
    o_ref[...] = (acc * inv_ref[...]).astype(o_ref.dtype)


@functools.partial(jax.jit, static_argnames=("block_m", "block_n"))
def am_softmax_linear(x, weight, *, block_m=256, block_n=512):
    """x: (batch, in_features); weight: (out_features, in_features)."""
    m, k = x.shape
    n, k_w = weight.shape
    assert k == k_w, "in_features mismatch"
    assert block_n % 128 == 0 and block_m % 16 == 0

    # Per-class inverse L2 norm (tiny (n,) f32), F.normalize(dim=1) eps rule.
    w32 = weight.astype(jnp.float32)
    inv_norm = 1.0 / jnp.maximum(jnp.sqrt(jnp.sum(w32 * w32, axis=1)), _EPS)

    # One-time transpose: contraction over the leading dim of the weight tile,
    # out_features on lanes.
    wt = weight.T  # (k, n)

    itemsize = jnp.dtype(x.dtype).itemsize
    sub = 8 if itemsize >= 4 else 16  # sublane multiple (f32 vs bf16/fp16)

    tm = block_m if m >= block_m else _round_up(m, sub)
    m_pad = _round_up(m, tm)

    n128 = _round_up(n, 128)
    tn = block_n if n128 >= block_n else n128
    n_pad = _round_up(n, tn)

    if m_pad != m:
        x = jnp.pad(x, ((0, m_pad - m), (0, 0)))
    if n_pad != n:
        wt = jnp.pad(wt, ((0, 0), (0, n_pad - n)))
        inv_norm = jnp.pad(inv_norm, (0, n_pad - n))
    inv_norm = inv_norm.reshape(1, n_pad)

    grid = (m_pad // tm, n_pad // tn)

    cost = pl.CostEstimate(
        flops=2 * m_pad * n_pad * k,
        bytes_accessed=(m_pad * k * itemsize
                        + k * n_pad * jnp.dtype(wt.dtype).itemsize
                        + m_pad * n_pad * itemsize
                        + n_pad * 4),
        transcendentals=0,
    )

    out = pl.pallas_call(
        _am_softmax_linear_kernel,
        out_shape=jax.ShapeDtypeStruct((m_pad, n_pad), x.dtype),
        grid_spec=pltpu.PrefetchScalarGridSpec(
            num_scalar_prefetch=0,
            grid=grid,
            in_specs=[
                pl.BlockSpec((tm, k), lambda i, j: (i, 0)),   # x tile
                pl.BlockSpec((k, tn), lambda i, j: (0, j)),   # weight.T tile
                pl.BlockSpec((1, tn), lambda i, j: (0, j)),   # inv_norm tile
            ],
            out_specs=pl.BlockSpec((tm, tn), lambda i, j: (i, j)),
        ),
        compiler_params=pltpu.CompilerParams(
            dimension_semantics=("parallel", "parallel"),
            vmem_limit_bytes=32 * 1024 * 1024,
        ),
        cost_estimate=cost,
    )(x, wt, inv_norm)

    return out[:m, :n]


def _reference(x, weight):
    w = weight.astype(jnp.float32)
    norm = jnp.sqrt(jnp.sum(w * w, axis=1, keepdims=True))
    w_n = w / jnp.maximum(norm, _EPS)
    return (x.astype(jnp.float32) @ w_n.T).astype(x.dtype)


if __name__ == "__main__":
    in_features = 32
    out_features = 16
    batch = 8

    key = jax.random.PRNGKey(0)
    kx, kw = jax.random.split(key)

    # Deterministic synthetic init (shape matches nn.Linear.weight).
    bound = 1.0 / (in_features ** 0.5)
    weight = jax.random.uniform(
        kw, (out_features, in_features), jnp.float32, minval=-bound, maxval=bound
    )
    x = jax.random.normal(kx, (batch, in_features), jnp.float32)

    out = am_softmax_linear(x, weight)
    out = jax.block_until_ready(out)

    ref = _reference(x, weight)
    assert out.shape == (batch, out_features)
    assert jnp.allclose(out, ref, atol=1e-5, rtol=1e-5), (
        f"max err {jnp.max(jnp.abs(out - ref))}"
    )

    print("KERNEL_OK")
</pallas_src>

<mosaic_0001>
module attributes {stable_mosaic.version = 11 : i64} {
  func.func @_am_softmax_linear_kernel(%arg0: i32, %arg1: i32, %arg2: memref<8x32xf32, #tpu.memory_space<vmem>>, %arg3: memref<32x128xf32, #tpu.memory_space<vmem>>, %arg4: memref<1x128xf32, #tpu.memory_space<vmem>>, %arg5: memref<8x128xf32, #tpu.memory_space<vmem>>) attributes {dimension_semantics = [#tpu.dimension_semantics<parallel>, #tpu.dimension_semantics<parallel>], iteration_bounds = array<i64: 1, 1>, scalar_prefetch = 0 : i64, scratch_operands = 0 : i64, tpu.core_type = #tpu.core_type<tc>, window_params = [{transform_indices = @transform_0, window_bounds = array<i64: 8, 32>}, {transform_indices = @transform_1, window_bounds = array<i64: 32, 128>}, {transform_indices = @transform_2, window_bounds = array<i64: 1, 128>}, {transform_indices = @transform_3, window_bounds = array<i64: 8, 128>}]} {
    %c0 = arith.constant 0 : index
    %c0_0 = arith.constant 0 : index
    %0 = vector.load %arg2[%c0, %c0_0] : memref<8x32xf32, #tpu.memory_space<vmem>>, vector<8x32xf32>
    %c0_1 = arith.constant 0 : index
    %c0_2 = arith.constant 0 : index
    %1 = vector.load %arg3[%c0_1, %c0_2] : memref<32x128xf32, #tpu.memory_space<vmem>>, vector<32x128xf32>
    %cst = arith.constant dense<0.000000e+00> : vector<8x128xf32>
    %2 = tpu.matmul %0, %1, %cst {dimension_numbers = #tpu.dot_dimension_numbers<[1], [0], [0], [1], [0, 0, 1, 1], [], []>} : vector<8x32xf32>, vector<32x128xf32>, vector<8x128xf32> -> vector<8x128xf32>
    %c0_3 = arith.constant 0 : index
    %c0_4 = arith.constant 0 : index
    %3 = vector.load %arg4[%c0_3, %c0_4] : memref<1x128xf32, #tpu.memory_space<vmem>>, vector<1x128xf32>
    %4 = vector.broadcast %3 : vector<1x128xf32> to vector<8x128xf32>
    %5 = arith.mulf %2, %4 : vector<8x128xf32>
    %c0_5 = arith.constant 0 : index
    %c0_6 = arith.constant 0 : index
    %6 = vector.load %arg5[%c0_5, %c0_6] : memref<8x128xf32, #tpu.memory_space<vmem>>, vector<8x128xf32>
    tpu.vector_store %arg5[%c0_5, %c0_6], %5 {strides = array<i32>} : memref<8x128xf32, #tpu.memory_space<vmem>>, vector<8x128xf32>,
    return
  }
  func.func @transform_0(%arg0: i32, %arg1: i32) -> (i32, i32) {
    %c0_i32 = arith.constant 0 : i32
    %c0_i32_0 = arith.constant 0 : i32
    return %arg0, %c0_i32 : i32, i32
  }
  func.func @transform_1(%arg0: i32, %arg1: i32) -> (i32, i32) {
    %c0_i32 = arith.constant 0 : i32
    %c0_i32_0 = arith.constant 0 : i32
    return %c0_i32, %arg1 : i32, i32
  }
  func.func @transform_2(%arg0: i32, %arg1: i32) -> (i32, i32) {
    %c0_i32 = arith.constant 0 : i32
    %c0_i32_0 = arith.constant 0 : i32
    return %c0_i32, %arg1 : i32, i32
  }
  func.func @transform_3(%arg0: i32, %arg1: i32) -> (i32, i32) {
    %c0_i32 = arith.constant 0 : i32
    return %arg0, %arg1 : i32, i32
  }
}

</mosaic_0001>

<llo_original>
// kernel: am_softmax_linear.1
$region0: #{am_softmax_linear.1}
  #allocation0 [shape = 'u32[]', space=smem, size = 0x4, offset = 0x4, fixed_abs, tag = 'smem constant byte address 0x4 - core index']
  #allocation1 [shape = 'u32[72,128]{1,0:T(1,128)}', space=vmem, size = 0x9000, scoped, tag = 'internal scratch']
  %s0 = inlined_call_operand.vmem [shape: f32[8,32], index: 0, kind: input, shape index: {}]
  %s1 = inlined_call_operand.vmem [shape: f32[32,128], index: 1, kind: input, shape index: {}]
  %s2 = inlined_call_operand.vmem [shape: f32[1,128], index: 2, kind: input, shape index: {}]
  %s3 = inlined_call_operand.hbm [shape: f32[8,128], index: 3, kind: output, shape index: {}]
  %s4 = sld [smem:[#allocation0]]
  $region22: #{am_softmax_linear.1} parent=0
    _
  %s6 = ssub.s32 1, %s4
  %s7 = scalar_select 0, %s6, %s4
  $region1: #{am_softmax_linear.1} parent=0
    #allocation2 [shape = 'u8[4096]{0}', space=vmem, size = 0x1000, scoped, tag = 'output window, operand 0, single buffered']
    #allocation3 [shape = 's32[1]{0}', space=sflag, size = 0x4, scoped, tag = 'scoped memory for am_softmax_linear.1']
    %8 = vsyncpa [#allocation3], 0
    // Predicated region
    $region2: #{am_softmax_linear.1} parent=1 // pred_check
      _
    $region3: #{am_softmax_linear.1} parent=1 // pred_check_branch
      %10 = sbr.rel (0) target = $region5
    $region4: #{am_softmax_linear.1} parent=1 // pred_region
      _
    $region5: #{am_softmax_linear.1} parent=1 // pred_fallthru
      _
    // Predicated region
    $region6: #{am_softmax_linear.1} parent=1 // pred_check
      _
    $region7: #{am_softmax_linear.1} parent=1 // pred_check_branch
      %12 = sbr.rel (0) target = $region9
    $region8: #{am_softmax_linear.1} parent=1 // pred_region
      _
    $region9: #{am_softmax_linear.1} parent=1 // pred_fallthru
      _
    // Predicated region
    $region10: #{am_softmax_linear.1} parent=1 // pred_check
      _
    $region11: #{am_softmax_linear.1} parent=1 // pred_check_branch
      %14 = sbr.rel (0) target = $region13
    $region12: #{am_softmax_linear.1} parent=1 // pred_region
      _
    $region13: #{am_softmax_linear.1} parent=1 // pred_fallthru
      _
    %v15 = vld [vmem:[%s0] sm:$0xff]
    %v16 = vld [vmem:[%s1] sm:$0xff]
    %v17 = vld [vmem:[%s1 + $0x8] sm:$0xff]
    %v18 = vld [vmem:[%s1 + $0x10] sm:$0xff]
    %v19 = vld [vmem:[%s1 + $0x18] sm:$0xff]
    %vm20 = vcmask 261120
    %v22 = vsel %vm20, %v15, 0
    %24 = vmatpush.msra.mxu0 0.0
    %25 = vmatpush.msra.mxu0 0.0
    %26 = vmatpush.msra.mxu0 0.0
    %27 = vmatpush.msra.mxu0 0.0
    %28 = vmatpush.msra.mxu0 0.0
    %29 = vmatpush.msra.mxu0 0.0
    %30 = vmatpush.msra.mxu0 0.0
    %31 = vmatpush.msra.mxu0 0.0
    %32 = vmatpush.msra.mxu0 0.0
    %33 = vmatpush.msra.mxu0 0.0
    %34 = vmatpush.msra.mxu0 0.0
    %35 = vmatpush.msra.mxu0 0.0
    %36 = vmatpush.msra.mxu0 %v19
    %37 = vmatpush.msra.mxu0 %v18
    %38 = vmatpush.msra.mxu0 %v17
    %39 = vmatpush.msra.mxu0 %v16
    %40 = vmatmul.f32.gmra.mxu0 %v22
    %v41 = vpop.f32.mrf.mxu0
    %v42 = vadd.f32 0.0, %v41
    %43 = vdwg.mxu0
    %v44 = vld [vmem:[%s2] sm:$0x1]
    %v46 = vperm.slane %v44, 0
    %v48 = vmul.f32 %v42, %v46
    %49 = vst [vmem:[#allocation2] sm:$0xff] %v48
    // Predicated region
    $region14: #{am_softmax_linear.1} parent=1 // pred_check
      _
    $region15: #{am_softmax_linear.1} parent=1 // pred_check_branch
      %51 = sbr.rel (0) target = $region17
    $region16: #{am_softmax_linear.1} parent=1 // pred_region
      %53 = vsyncadd [#allocation3], 0
      %s55 = sshll.u32 [#allocation2], 4
      %s56 = int_to_ptr.vmem [resolvable:$true] %s55
      %s57 = sshll.u32 %s3, 4
      %s58 = int_to_ptr.hbm [resolvable:$true] %s57
      %60 = dma.vmem_to_hbm [thread:$0]  %s56, 128, %s58, [#allocation3]
    $region17: #{am_softmax_linear.1} parent=1 // pred_fallthru
      _
    // Predicated region
    $region18: #{am_softmax_linear.1} parent=1 // pred_check
      _
    $region19: #{am_softmax_linear.1} parent=1 // pred_check_branch
      %62 = sbr.rel (0) target = $region21
    $region20: #{am_softmax_linear.1} parent=1 // pred_region
      %64 = dma.done [#allocation3], 128
    $region21: #{am_softmax_linear.1} parent=1 // pred_fallthru
      _
    %65 = vsyncpa [#allocation3], 1

</llo_original>
